<compile_context>
chip_gen: v5e
topology: v5e:2x2
jax: 0.10.0
libtpu: 0.0.40
codegen_flags: <defaults>
</compile_context>

<pallas_src>
import jax
import jax.numpy as jnp
from jax.experimental import pallas as pl
from jax.experimental.pallas import tpu as pltpu

IN_FEATURES = 10
HIDDEN = 16
NUM_CLASSES = 3


def _round_up(x, m):
    return (x + m - 1) // m * m


def _cdiv(a, b):
    return (a + b - 1) // b


def _linear_vpu(w, b, x):
    """y = w @ x + b as unrolled VPU outer-product accumulation.

    w: [O, K] (torch Linear layout), b: [O, 1], x: [K, TB] feature-major.
    Returns [O, TB] float32.  With O<=16 and K<=16 the MXU would pad to a
    256x256 (128x128 on v5e) pass at <2% utilization, so instead accumulate
    column([O,1]) * row([1,TB]) products on the VPU at full lane occupancy.
    """
    w = w.astype(jnp.float32)
    out_dim, k_dim = w.shape
    tb = x.shape[1]
    acc = jnp.broadcast_to(b.astype(jnp.float32), (out_dim, tb))  # bias = init
    for k in range(k_dim):
        acc = acc + w[:, k:k + 1] * x[k:k + 1, :]
    return acc


def mlp_softmax_kernel(x_ref, w1_ref, b1_ref, w2_ref, b2_ref, w3_ref, b3_ref,
                       o_ref):
    """One batch tile.  x_ref: [TB, 10] batch-major, o_ref: [TB, 3]."""
    # Transpose on the XLU (idle in this kernel) so the VPU math runs
    # feature-major: batch on the 128-wide lane axis, features on sublanes.
    x = jnp.transpose(x_ref[...].astype(jnp.float32))                    # [10, TB]

    h1 = jnp.maximum(_linear_vpu(w1_ref[...], b1_ref[...], x), 0.0)      # [16, TB]
    h2 = jnp.maximum(_linear_vpu(w2_ref[...], b2_ref[...], h1), 0.0)     # [16, TB]
    logits = _linear_vpu(w3_ref[...], b3_ref[...], h2)                   # [3, TB]

    # Softmax over the 3 class rows: explicit elementwise max/add of the rows
    # (stays off the XLU reduce path) and an EXACT divide so rows sum to 1.
    rows = [logits[c:c + 1, :] for c in range(NUM_CLASSES)]
    m = rows[0]
    for r in rows[1:]:
        m = jnp.maximum(m, r)                                            # [1, TB]
    e = jnp.exp(logits - m)                                              # [3, TB]
    denom = e[0:1, :]
    for c in range(1, NUM_CLASSES):
        denom = denom + e[c:c + 1, :]                                    # [1, TB]
    probs = e / denom                                                    # [3, TB]

    # Transpose back so the wrapper needs no layout pass; the output is only
    # 12 B/row, so the lane-sparse store is cheap relative to the compute.
    o_ref[...] = jnp.transpose(probs).astype(o_ref.dtype)               # [TB, 3]


def sequential_nn_forward(x, params, *, block_batch=16384, stream_dtype=None,
                          vmem_limit_bytes=None):
    """x: [B, 10]  ->  probs: [B, NUM_CLASSES] float32.

    block_batch: target rows per grid step (rounded to a multiple of 128).
                 16384 keeps per-tile VMEM ~5-7 MiB (safe on every generation,
                 incl. v7x's 64 MiB physical VMEM); on v5e/v6e large batches
                 can use 32768-65536 together with vmem_limit_bytes.
    stream_dtype: e.g. jnp.bfloat16 to halve input HBM traffic (v5e); the
                  kernel upcasts to f32 before any VPU math.
    """
    w1, b1, w2, b2, w3, b3 = params
    B = x.shape[0]

    # Pad the batch only to the 128-lane width; balance the tiles so the
    # ragged tail wastes at most ~128 rows per tile instead of up to TB-128.
    B128 = _round_up(max(B, 1), 128)
    tb_target = max(_round_up(block_batch, 128), 128)
    n_tiles = max(_cdiv(B128, tb_target), 1)
    TB = _round_up(_cdiv(B128, n_tiles), 128)
    B_pad = n_tiles * TB

    if stream_dtype is not None:
        x = x.astype(stream_dtype)
    if B_pad != B:
        x = jnp.pad(x, ((0, B_pad - B), (0, 0)))   # zero rows, sliced off below

    # Weights/biases: full-array blocks with a constant index_map -> fetched
    # once and VMEM-resident across all batch tiles (<3 KiB total).
    resident = lambda arr: pl.BlockSpec(arr.shape, lambda i: (0, 0))

    cost = pl.CostEstimate(
        flops=2 * B_pad * (IN_FEATURES * HIDDEN + HIDDEN * HIDDEN
                           + HIDDEN * NUM_CLASSES),
        transcendentals=NUM_CLASSES * B_pad,
        bytes_accessed=B_pad * (IN_FEATURES * x.dtype.itemsize + NUM_CLASSES * 4)
        + sum(a.size * a.dtype.itemsize for a in params),
    )

    out = pl.pallas_call(
        mlp_softmax_kernel,
        out_shape=jax.ShapeDtypeStruct((B_pad, NUM_CLASSES), jnp.float32),
        grid=(n_tiles,),
        in_specs=[
            pl.BlockSpec((TB, IN_FEATURES), lambda i: (i, 0)),  # x: batch-tiled
            resident(w1), resident(b1),
            resident(w2), resident(b2),
            resident(w3), resident(b3),
        ],
        out_specs=pl.BlockSpec((TB, NUM_CLASSES), lambda i: (i, 0)),
        compiler_params=pltpu.CompilerParams(
            # Batch tiles are independent.  On v7x, if a trace shows only one
            # TensorCore active, switch this axis to pltpu.CORE_PARALLEL.
            dimension_semantics=(pltpu.PARALLEL,),
            vmem_limit_bytes=vmem_limit_bytes,
        ),
        cost_estimate=cost,
    )(x, w1, b1, w2, b2, w3, b3)

    return out if B_pad == B else out[:B]                       # [B, NUM_CLASSES]


def init_params(key):
    """torch.nn.Linear-style init: W is [out, in], b is [out, 1], U(-1/sqrt(fan_in), +)."""
    ks = jax.random.split(key, 6)

    def linear(kw, kb, fan_in, fan_out):
        bound = 1.0 / jnp.sqrt(float(fan_in))
        w = jax.random.uniform(kw, (fan_out, fan_in), jnp.float32, -bound, bound)
        b = jax.random.uniform(kb, (fan_out, 1), jnp.float32, -bound, bound)
        return w, b

    w1, b1 = linear(ks[0], ks[1], IN_FEATURES, HIDDEN)
    w2, b2 = linear(ks[2], ks[3], HIDDEN, HIDDEN)
    w3, b3 = linear(ks[4], ks[5], HIDDEN, NUM_CLASSES)
    return (w1, b1, w2, b2, w3, b3)


if __name__ == "__main__":
    # TODO(synk): only the forward pass is implemented; CrossEntropyLoss /
    # RMSprop / backward from the original training script are out of scope.
    key = jax.random.PRNGKey(0)
    k_params, k_x = jax.random.split(key)

    params = init_params(k_params)
    batch = 8
    x = jax.random.normal(k_x, (batch, IN_FEATURES), jnp.float32)

    probs = sequential_nn_forward(x, params)
    probs = jax.block_until_ready(probs)

    # Reference in plain JAX (same math as the PyTorch module; torch weight layout).
    w1, b1, w2, b2, w3, b3 = params
    h1 = jnp.maximum(x @ w1.T + b1[:, 0], 0.0)
    h2 = jnp.maximum(h1 @ w2.T + b2[:, 0], 0.0)
    logits = h2 @ w3.T + b3[:, 0]
    ref = jax.nn.softmax(logits, axis=1)

    assert probs.shape == (batch, NUM_CLASSES)
    assert jnp.allclose(probs, ref, atol=1e-4, rtol=1e-4)
    assert jnp.allclose(jnp.sum(probs, axis=1), 1.0, atol=1e-5)

    print("KERNEL_OK")
</pallas_src>

<mosaic_0001>
module attributes {stable_mosaic.version = 11 : i64} {
  func.func @mlp_softmax_kernel(%arg0: i32, %arg1: memref<128x10xf32, #tpu.memory_space<vmem>>, %arg2: memref<16x10xf32, #tpu.memory_space<vmem>>, %arg3: memref<16x1xf32, #tpu.memory_space<vmem>>, %arg4: memref<16x16xf32, #tpu.memory_space<vmem>>, %arg5: memref<16x1xf32, #tpu.memory_space<vmem>>, %arg6: memref<3x16xf32, #tpu.memory_space<vmem>>, %arg7: memref<3x1xf32, #tpu.memory_space<vmem>>, %arg8: memref<128x3xf32, #tpu.memory_space<vmem>>) attributes {dimension_semantics = [#tpu.dimension_semantics<parallel>], iteration_bounds = array<i64: 1>, scalar_prefetch = 0 : i64, scratch_operands = 0 : i64, tpu.core_type = #tpu.core_type<tc>, window_params = [{transform_indices = @transform_0, window_bounds = array<i64: 128, 10>}, {pipeline_mode = #tpu.pipeline_mode<synchronous>, transform_indices = @transform_1, window_bounds = array<i64: 16, 10>}, {pipeline_mode = #tpu.pipeline_mode<synchronous>, transform_indices = @transform_2, window_bounds = array<i64: 16, 1>}, {pipeline_mode = #tpu.pipeline_mode<synchronous>, transform_indices = @transform_3, window_bounds = array<i64: 16, 16>}, {pipeline_mode = #tpu.pipeline_mode<synchronous>, transform_indices = @transform_4, window_bounds = array<i64: 16, 1>}, {pipeline_mode = #tpu.pipeline_mode<synchronous>, transform_indices = @transform_5, window_bounds = array<i64: 3, 16>}, {pipeline_mode = #tpu.pipeline_mode<synchronous>, transform_indices = @transform_6, window_bounds = array<i64: 3, 1>}, {transform_indices = @transform_7, window_bounds = array<i64: 128, 3>}]} {
    %c0 = arith.constant 0 : index
    %c0_0 = arith.constant 0 : index
    %0 = vector.load %arg1[%c0, %c0_0] : memref<128x10xf32, #tpu.memory_space<vmem>>, vector<128x10xf32>
    %1 = tpu.transpose %0, [1, 0] : vector<128x10xf32> -> vector<10x128xf32>
    %c0_1 = arith.constant 0 : index
    %c0_2 = arith.constant 0 : index
    %2 = vector.load %arg2[%c0_1, %c0_2] : memref<16x10xf32, #tpu.memory_space<vmem>>, vector<16x10xf32>
    %c0_3 = arith.constant 0 : index
    %c0_4 = arith.constant 0 : index
    %3 = vector.load %arg3[%c0_3, %c0_4] : memref<16x1xf32, #tpu.memory_space<vmem>>, vector<16x1xf32>
    %4 = vector.shape_cast %3 : vector<16x1xf32> to vector<16x1xf32>
    %5 = vector.broadcast %4 : vector<16x1xf32> to vector<16x128xf32>
    %6 = vector.extract_strided_slice %2 {offsets = [0, 0], sizes = [16, 1], strides = [1, 1]} : vector<16x10xf32> to vector<16x1xf32>
    %7 = vector.extract_strided_slice %1 {offsets = [0, 0], sizes = [1, 128], strides = [1, 1]} : vector<10x128xf32> to vector<1x128xf32>
    %8 = vector.broadcast %6 : vector<16x1xf32> to vector<16x128xf32>
    %9 = vector.broadcast %7 : vector<1x128xf32> to vector<16x128xf32>
    %10 = arith.mulf %8, %9 : vector<16x128xf32>
    %11 = arith.addf %5, %10 : vector<16x128xf32>
    %12 = vector.extract_strided_slice %2 {offsets = [0, 1], sizes = [16, 1], strides = [1, 1]} : vector<16x10xf32> to vector<16x1xf32>
    %13 = vector.extract_strided_slice %1 {offsets = [1, 0], sizes = [1, 128], strides = [1, 1]} : vector<10x128xf32> to vector<1x128xf32>
    %14 = vector.broadcast %12 : vector<16x1xf32> to vector<16x128xf32>
    %15 = vector.broadcast %13 : vector<1x128xf32> to vector<16x128xf32>
    %16 = arith.mulf %14, %15 : vector<16x128xf32>
    %17 = arith.addf %11, %16 : vector<16x128xf32>
    %18 = vector.extract_strided_slice %2 {offsets = [0, 2], sizes = [16, 1], strides = [1, 1]} : vector<16x10xf32> to vector<16x1xf32>
    %19 = vector.extract_strided_slice %1 {offsets = [2, 0], sizes = [1, 128], strides = [1, 1]} : vector<10x128xf32> to vector<1x128xf32>
    %20 = vector.broadcast %18 : vector<16x1xf32> to vector<16x128xf32>
    %21 = vector.broadcast %19 : vector<1x128xf32> to vector<16x128xf32>
    %22 = arith.mulf %20, %21 : vector<16x128xf32>
    %23 = arith.addf %17, %22 : vector<16x128xf32>
    %24 = vector.extract_strided_slice %2 {offsets = [0, 3], sizes = [16, 1], strides = [1, 1]} : vector<16x10xf32> to vector<16x1xf32>
    %25 = vector.extract_strided_slice %1 {offsets = [3, 0], sizes = [1, 128], strides = [1, 1]} : vector<10x128xf32> to vector<1x128xf32>
    %26 = vector.broadcast %24 : vector<16x1xf32> to vector<16x128xf32>
    %27 = vector.broadcast %25 : vector<1x128xf32> to vector<16x128xf32>
    %28 = arith.mulf %26, %27 : vector<16x128xf32>
    %29 = arith.addf %23, %28 : vector<16x128xf32>
    %30 = vector.extract_strided_slice %2 {offsets = [0, 4], sizes = [16, 1], strides = [1, 1]} : vector<16x10xf32> to vector<16x1xf32>
    %31 = vector.extract_strided_slice %1 {offsets = [4, 0], sizes = [1, 128], strides = [1, 1]} : vector<10x128xf32> to vector<1x128xf32>
    %32 = vector.broadcast %30 : vector<16x1xf32> to vector<16x128xf32>
    %33 = vector.broadcast %31 : vector<1x128xf32> to vector<16x128xf32>
    %34 = arith.mulf %32, %33 : vector<16x128xf32>
    %35 = arith.addf %29, %34 : vector<16x128xf32>
    %36 = vector.extract_strided_slice %2 {offsets = [0, 5], sizes = [16, 1], strides = [1, 1]} : vector<16x10xf32> to vector<16x1xf32>
    %37 = vector.extract_strided_slice %1 {offsets = [5, 0], sizes = [1, 128], strides = [1, 1]} : vector<10x128xf32> to vector<1x128xf32>
    %38 = vector.broadcast %36 : vector<16x1xf32> to vector<16x128xf32>
    %39 = vector.broadcast %37 : vector<1x128xf32> to vector<16x128xf32>
    %40 = arith.mulf %38, %39 : vector<16x128xf32>
    %41 = arith.addf %35, %40 : vector<16x128xf32>
    %42 = vector.extract_strided_slice %2 {offsets = [0, 6], sizes = [16, 1], strides = [1, 1]} : vector<16x10xf32> to vector<16x1xf32>
    %43 = vector.extract_strided_slice %1 {offsets = [6, 0], sizes = [1, 128], strides = [1, 1]} : vector<10x128xf32> to vector<1x128xf32>
    %44 = vector.broadcast %42 : vector<16x1xf32> to vector<16x128xf32>
    %45 = vector.broadcast %43 : vector<1x128xf32> to vector<16x128xf32>
    %46 = arith.mulf %44, %45 : vector<16x128xf32>
    %47 = arith.addf %41, %46 : vector<16x128xf32>
    %48 = vector.extract_strided_slice %2 {offsets = [0, 7], sizes = [16, 1], strides = [1, 1]} : vector<16x10xf32> to vector<16x1xf32>
    %49 = vector.extract_strided_slice %1 {offsets = [7, 0], sizes = [1, 128], strides = [1, 1]} : vector<10x128xf32> to vector<1x128xf32>
    %50 = vector.broadcast %48 : vector<16x1xf32> to vector<16x128xf32>
    %51 = vector.broadcast %49 : vector<1x128xf32> to vector<16x128xf32>
    %52 = arith.mulf %50, %51 : vector<16x128xf32>
    %53 = arith.addf %47, %52 : vector<16x128xf32>
    %54 = vector.extract_strided_slice %2 {offsets = [0, 8], sizes = [16, 1], strides = [1, 1]} : vector<16x10xf32> to vector<16x1xf32>
    %55 = vector.extract_strided_slice %1 {offsets = [8, 0], sizes = [1, 128], strides = [1, 1]} : vector<10x128xf32> to vector<1x128xf32>
    %56 = vector.broadcast %54 : vector<16x1xf32> to vector<16x128xf32>
    %57 = vector.broadcast %55 : vector<1x128xf32> to vector<16x128xf32>
    %58 = arith.mulf %56, %57 : vector<16x128xf32>
    %59 = arith.addf %53, %58 : vector<16x128xf32>
    %60 = vector.extract_strided_slice %2 {offsets = [0, 9], sizes = [16, 1], strides = [1, 1]} : vector<16x10xf32> to vector<16x1xf32>
    %61 = vector.extract_strided_slice %1 {offsets = [9, 0], sizes = [1, 128], strides = [1, 1]} : vector<10x128xf32> to vector<1x128xf32>
    %62 = vector.broadcast %60 : vector<16x1xf32> to vector<16x128xf32>
    %63 = vector.broadcast %61 : vector<1x128xf32> to vector<16x128xf32>
    %64 = arith.mulf %62, %63 : vector<16x128xf32>
    %65 = arith.addf %59, %64 : vector<16x128xf32>
    %cst = arith.constant 0.000000e+00 : f32
    %66 = vector.broadcast %cst : f32 to vector<16x128xf32>
    %67 = arith.maximumf %65, %66 : vector<16x128xf32>
    %c0_5 = arith.constant 0 : index
    %c0_6 = arith.constant 0 : index
    %68 = vector.load %arg4[%c0_5, %c0_6] : memref<16x16xf32, #tpu.memory_space<vmem>>, vector<16x16xf32>
    %c0_7 = arith.constant 0 : index
    %c0_8 = arith.constant 0 : index
    %69 = vector.load %arg5[%c0_7, %c0_8] : memref<16x1xf32, #tpu.memory_space<vmem>>, vector<16x1xf32>
    %70 = vector.shape_cast %69 : vector<16x1xf32> to vector<16x1xf32>
    %71 = vector.broadcast %70 : vector<16x1xf32> to vector<16x128xf32>
    %72 = vector.extract_strided_slice %68 {offsets = [0, 0], sizes = [16, 1], strides = [1, 1]} : vector<16x16xf32> to vector<16x1xf32>
    %73 = vector.extract_strided_slice %67 {offsets = [0, 0], sizes = [1, 128], strides = [1, 1]} : vector<16x128xf32> to vector<1x128xf32>
    %74 = vector.broadcast %72 : vector<16x1xf32> to vector<16x128xf32>
    %75 = vector.broadcast %73 : vector<1x128xf32> to vector<16x128xf32>
    %76 = arith.mulf %74, %75 : vector<16x128xf32>
    %77 = arith.addf %71, %76 : vector<16x128xf32>
    %78 = vector.extract_strided_slice %68 {offsets = [0, 1], sizes = [16, 1], strides = [1, 1]} : vector<16x16xf32> to vector<16x1xf32>
    %79 = vector.extract_strided_slice %67 {offsets = [1, 0], sizes = [1, 128], strides = [1, 1]} : vector<16x128xf32> to vector<1x128xf32>
    %80 = vector.broadcast %78 : vector<16x1xf32> to vector<16x128xf32>
    %81 = vector.broadcast %79 : vector<1x128xf32> to vector<16x128xf32>
    %82 = arith.mulf %80, %81 : vector<16x128xf32>
    %83 = arith.addf %77, %82 : vector<16x128xf32>
    %84 = vector.extract_strided_slice %68 {offsets = [0, 2], sizes = [16, 1], strides = [1, 1]} : vector<16x16xf32> to vector<16x1xf32>
    %85 = vector.extract_strided_slice %67 {offsets = [2, 0], sizes = [1, 128], strides = [1, 1]} : vector<16x128xf32> to vector<1x128xf32>
    %86 = vector.broadcast %84 : vector<16x1xf32> to vector<16x128xf32>
    %87 = vector.broadcast %85 : vector<1x128xf32> to vector<16x128xf32>
    %88 = arith.mulf %86, %87 : vector<16x128xf32>
    %89 = arith.addf %83, %88 : vector<16x128xf32>
    %90 = vector.extract_strided_slice %68 {offsets = [0, 3], sizes = [16, 1], strides = [1, 1]} : vector<16x16xf32> to vector<16x1xf32>
    %91 = vector.extract_strided_slice %67 {offsets = [3, 0], sizes = [1, 128], strides = [1, 1]} : vector<16x128xf32> to vector<1x128xf32>
    %92 = vector.broadcast %90 : vector<16x1xf32> to vector<16x128xf32>
    %93 = vector.broadcast %91 : vector<1x128xf32> to vector<16x128xf32>
    %94 = arith.mulf %92, %93 : vector<16x128xf32>
    %95 = arith.addf %89, %94 : vector<16x128xf32>
    %96 = vector.extract_strided_slice %68 {offsets = [0, 4], sizes = [16, 1], strides = [1, 1]} : vector<16x16xf32> to vector<16x1xf32>
    %97 = vector.extract_strided_slice %67 {offsets = [4, 0], sizes = [1, 128], strides = [1, 1]} : vector<16x128xf32> to vector<1x128xf32>
    %98 = vector.broadcast %96 : vector<16x1xf32> to vector<16x128xf32>
    %99 = vector.broadcast %97 : vector<1x128xf32> to vector<16x128xf32>
    %100 = arith.mulf %98, %99 : vector<16x128xf32>
    %101 = arith.addf %95, %100 : vector<16x128xf32>
    %102 = vector.extract_strided_slice %68 {offsets = [0, 5], sizes = [16, 1], strides = [1, 1]} : vector<16x16xf32> to vector<16x1xf32>
    %103 = vector.extract_strided_slice %67 {offsets = [5, 0], sizes = [1, 128], strides = [1, 1]} : vector<16x128xf32> to vector<1x128xf32>
    %104 = vector.broadcast %102 : vector<16x1xf32> to vector<16x128xf32>
    %105 = vector.broadcast %103 : vector<1x128xf32> to vector<16x128xf32>
    %106 = arith.mulf %104, %105 : vector<16x128xf32>
    %107 = arith.addf %101, %106 : vector<16x128xf32>
    %108 = vector.extract_strided_slice %68 {offsets = [0, 6], sizes = [16, 1], strides = [1, 1]} : vector<16x16xf32> to vector<16x1xf32>
    %109 = vector.extract_strided_slice %67 {offsets = [6, 0], sizes = [1, 128], strides = [1, 1]} : vector<16x128xf32> to vector<1x128xf32>
    %110 = vector.broadcast %108 : vector<16x1xf32> to vector<16x128xf32>
    %111 = vector.broadcast %109 : vector<1x128xf32> to vector<16x128xf32>
    %112 = arith.mulf %110, %111 : vector<16x128xf32>
    %113 = arith.addf %107, %112 : vector<16x128xf32>
    %114 = vector.extract_strided_slice %68 {offsets = [0, 7], sizes = [16, 1], strides = [1, 1]} : vector<16x16xf32> to vector<16x1xf32>
    %115 = vector.extract_strided_slice %67 {offsets = [7, 0], sizes = [1, 128], strides = [1, 1]} : vector<16x128xf32> to vector<1x128xf32>
    %116 = vector.broadcast %114 : vector<16x1xf32> to vector<16x128xf32>
    %117 = vector.broadcast %115 : vector<1x128xf32> to vector<16x128xf32>
    %118 = arith.mulf %116, %117 : vector<16x128xf32>
    %119 = arith.addf %113, %118 : vector<16x128xf32>
    %120 = vector.extract_strided_slice %68 {offsets = [0, 8], sizes = [16, 1], strides = [1, 1]} : vector<16x16xf32> to vector<16x1xf32>
    %121 = vector.extract_strided_slice %67 {offsets = [8, 0], sizes = [1, 128], strides = [1, 1]} : vector<16x128xf32> to vector<1x128xf32>
    %122 = vector.broadcast %120 : vector<16x1xf32> to vector<16x128xf32>
    %123 = vector.broadcast %121 : vector<1x128xf32> to vector<16x128xf32>
    %124 = arith.mulf %122, %123 : vector<16x128xf32>
    %125 = arith.addf %119, %124 : vector<16x128xf32>
    %126 = vector.extract_strided_slice %68 {offsets = [0, 9], sizes = [16, 1], strides = [1, 1]} : vector<16x16xf32> to vector<16x1xf32>
    %127 = vector.extract_strided_slice %67 {offsets = [9, 0], sizes = [1, 128], strides = [1, 1]} : vector<16x128xf32> to vector<1x128xf32>
    %128 = vector.broadcast %126 : vector<16x1xf32> to vector<16x128xf32>
    %129 = vector.broadcast %127 : vector<1x128xf32> to vector<16x128xf32>
    %130 = arith.mulf %128, %129 : vector<16x128xf32>
    %131 = arith.addf %125, %130 : vector<16x128xf32>
    %132 = vector.extract_strided_slice %68 {offsets = [0, 10], sizes = [16, 1], strides = [1, 1]} : vector<16x16xf32> to vector<16x1xf32>
    %133 = vector.extract_strided_slice %67 {offsets = [10, 0], sizes = [1, 128], strides = [1, 1]} : vector<16x128xf32> to vector<1x128xf32>
    %134 = vector.broadcast %132 : vector<16x1xf32> to vector<16x128xf32>
    %135 = vector.broadcast %133 : vector<1x128xf32> to vector<16x128xf32>
    %136 = arith.mulf %134, %135 : vector<16x128xf32>
    %137 = arith.addf %131, %136 : vector<16x128xf32>
    %138 = vector.extract_strided_slice %68 {offsets = [0, 11], sizes = [16, 1], strides = [1, 1]} : vector<16x16xf32> to vector<16x1xf32>
    %139 = vector.extract_strided_slice %67 {offsets = [11, 0], sizes = [1, 128], strides = [1, 1]} : vector<16x128xf32> to vector<1x128xf32>
    %140 = vector.broadcast %138 : vector<16x1xf32> to vector<16x128xf32>
    %141 = vector.broadcast %139 : vector<1x128xf32> to vector<16x128xf32>
    %142 = arith.mulf %140, %141 : vector<16x128xf32>
    %143 = arith.addf %137, %142 : vector<16x128xf32>
    %144 = vector.extract_strided_slice %68 {offsets = [0, 12], sizes = [16, 1], strides = [1, 1]} : vector<16x16xf32> to vector<16x1xf32>
    %145 = vector.extract_strided_slice %67 {offsets = [12, 0], sizes = [1, 128], strides = [1, 1]} : vector<16x128xf32> to vector<1x128xf32>
    %146 = vector.broadcast %144 : vector<16x1xf32> to vector<16x128xf32>
    %147 = vector.broadcast %145 : vector<1x128xf32> to vector<16x128xf32>
    %148 = arith.mulf %146, %147 : vector<16x128xf32>
    %149 = arith.addf %143, %148 : vector<16x128xf32>
    %150 = vector.extract_strided_slice %68 {offsets = [0, 13], sizes = [16, 1], strides = [1, 1]} : vector<16x16xf32> to vector<16x1xf32>
    %151 = vector.extract_strided_slice %67 {offsets = [13, 0], sizes = [1, 128], strides = [1, 1]} : vector<16x128xf32> to vector<1x128xf32>
    %152 = vector.broadcast %150 : vector<16x1xf32> to vector<16x128xf32>
    %153 = vector.broadcast %151 : vector<1x128xf32> to vector<16x128xf32>
    %154 = arith.mulf %152, %153 : vector<16x128xf32>
    %155 = arith.addf %149, %154 : vector<16x128xf32>
    %156 = vector.extract_strided_slice %68 {offsets = [0, 14], sizes = [16, 1], strides = [1, 1]} : vector<16x16xf32> to vector<16x1xf32>
    %157 = vector.extract_strided_slice %67 {offsets = [14, 0], sizes = [1, 128], strides = [1, 1]} : vector<16x128xf32> to vector<1x128xf32>
    %158 = vector.broadcast %156 : vector<16x1xf32> to vector<16x128xf32>
    %159 = vector.broadcast %157 : vector<1x128xf32> to vector<16x128xf32>
    %160 = arith.mulf %158, %159 : vector<16x128xf32>
    %161 = arith.addf %155, %160 : vector<16x128xf32>
    %162 = vector.extract_strided_slice %68 {offsets = [0, 15], sizes = [16, 1], strides = [1, 1]} : vector<16x16xf32> to vector<16x1xf32>
    %163 = vector.extract_strided_slice %67 {offsets = [15, 0], sizes = [1, 128], strides = [1, 1]} : vector<16x128xf32> to vector<1x128xf32>
    %164 = vector.broadcast %162 : vector<16x1xf32> to vector<16x128xf32>
    %165 = vector.broadcast %163 : vector<1x128xf32> to vector<16x128xf32>
    %166 = arith.mulf %164, %165 : vector<16x128xf32>
    %167 = arith.addf %161, %166 : vector<16x128xf32>
    %cst_9 = arith.constant 0.000000e+00 : f32
    %168 = vector.broadcast %cst_9 : f32 to vector<16x128xf32>
    %169 = arith.maximumf %167, %168 : vector<16x128xf32>
    %c0_10 = arith.constant 0 : index
    %c0_11 = arith.constant 0 : index
    %170 = vector.load %arg6[%c0_10, %c0_11] : memref<3x16xf32, #tpu.memory_space<vmem>>, vector<3x16xf32>
    %c0_12 = arith.constant 0 : index
    %c0_13 = arith.constant 0 : index
    %171 = vector.load %arg7[%c0_12, %c0_13] : memref<3x1xf32, #tpu.memory_space<vmem>>, vector<3x1xf32>
    %172 = vector.shape_cast %171 : vector<3x1xf32> to vector<3x1xf32>
    %173 = vector.broadcast %172 : vector<3x1xf32> to vector<3x128xf32>
    %174 = vector.extract_strided_slice %170 {offsets = [0, 0], sizes = [3, 1], strides = [1, 1]} : vector<3x16xf32> to vector<3x1xf32>
    %175 = vector.extract_strided_slice %169 {offsets = [0, 0], sizes = [1, 128], strides = [1, 1]} : vector<16x128xf32> to vector<1x128xf32>
    %176 = vector.broadcast %174 : vector<3x1xf32> to vector<3x128xf32>
    %177 = vector.broadcast %175 : vector<1x128xf32> to vector<3x128xf32>
    %178 = arith.mulf %176, %177 : vector<3x128xf32>
    %179 = arith.addf %173, %178 : vector<3x128xf32>
    %180 = vector.extract_strided_slice %170 {offsets = [0, 1], sizes = [3, 1], strides = [1, 1]} : vector<3x16xf32> to vector<3x1xf32>
    %181 = vector.extract_strided_slice %169 {offsets = [1, 0], sizes = [1, 128], strides = [1, 1]} : vector<16x128xf32> to vector<1x128xf32>
    %182 = vector.broadcast %180 : vector<3x1xf32> to vector<3x128xf32>
    %183 = vector.broadcast %181 : vector<1x128xf32> to vector<3x128xf32>
    %184 = arith.mulf %182, %183 : vector<3x128xf32>
    %185 = arith.addf %179, %184 : vector<3x128xf32>
    %186 = vector.extract_strided_slice %170 {offsets = [0, 2], sizes = [3, 1], strides = [1, 1]} : vector<3x16xf32> to vector<3x1xf32>
    %187 = vector.extract_strided_slice %169 {offsets = [2, 0], sizes = [1, 128], strides = [1, 1]} : vector<16x128xf32> to vector<1x128xf32>
    %188 = vector.broadcast %186 : vector<3x1xf32> to vector<3x128xf32>
    %189 = vector.broadcast %187 : vector<1x128xf32> to vector<3x128xf32>
    %190 = arith.mulf %188, %189 : vector<3x128xf32>
    %191 = arith.addf %185, %190 : vector<3x128xf32>
    %192 = vector.extract_strided_slice %170 {offsets = [0, 3], sizes = [3, 1], strides = [1, 1]} : vector<3x16xf32> to vector<3x1xf32>
    %193 = vector.extract_strided_slice %169 {offsets = [3, 0], sizes = [1, 128], strides = [1, 1]} : vector<16x128xf32> to vector<1x128xf32>
    %194 = vector.broadcast %192 : vector<3x1xf32> to vector<3x128xf32>
    %195 = vector.broadcast %193 : vector<1x128xf32> to vector<3x128xf32>
    %196 = arith.mulf %194, %195 : vector<3x128xf32>
    %197 = arith.addf %191, %196 : vector<3x128xf32>
    %198 = vector.extract_strided_slice %170 {offsets = [0, 4], sizes = [3, 1], strides = [1, 1]} : vector<3x16xf32> to vector<3x1xf32>
    %199 = vector.extract_strided_slice %169 {offsets = [4, 0], sizes = [1, 128], strides = [1, 1]} : vector<16x128xf32> to vector<1x128xf32>
    %200 = vector.broadcast %198 : vector<3x1xf32> to vector<3x128xf32>
    %201 = vector.broadcast %199 : vector<1x128xf32> to vector<3x128xf32>
    %202 = arith.mulf %200, %201 : vector<3x128xf32>
    %203 = arith.addf %197, %202 : vector<3x128xf32>
    %204 = vector.extract_strided_slice %170 {offsets = [0, 5], sizes = [3, 1], strides = [1, 1]} : vector<3x16xf32> to vector<3x1xf32>
    %205 = vector.extract_strided_slice %169 {offsets = [5, 0], sizes = [1, 128], strides = [1, 1]} : vector<16x128xf32> to vector<1x128xf32>
    %206 = vector.broadcast %204 : vector<3x1xf32> to vector<3x128xf32>
    %207 = vector.broadcast %205 : vector<1x128xf32> to vector<3x128xf32>
    %208 = arith.mulf %206, %207 : vector<3x128xf32>
    %209 = arith.addf %203, %208 : vector<3x128xf32>
    %210 = vector.extract_strided_slice %170 {offsets = [0, 6], sizes = [3, 1], strides = [1, 1]} : vector<3x16xf32> to vector<3x1xf32>
    %211 = vector.extract_strided_slice %169 {offsets = [6, 0], sizes = [1, 128], strides = [1, 1]} : vector<16x128xf32> to vector<1x128xf32>
    %212 = vector.broadcast %210 : vector<3x1xf32> to vector<3x128xf32>
    %213 = vector.broadcast %211 : vector<1x128xf32> to vector<3x128xf32>
    %214 = arith.mulf %212, %213 : vector<3x128xf32>
    %215 = arith.addf %209, %214 : vector<3x128xf32>
    %216 = vector.extract_strided_slice %170 {offsets = [0, 7], sizes = [3, 1], strides = [1, 1]} : vector<3x16xf32> to vector<3x1xf32>
    %217 = vector.extract_strided_slice %169 {offsets = [7, 0], sizes = [1, 128], strides = [1, 1]} : vector<16x128xf32> to vector<1x128xf32>
    %218 = vector.broadcast %216 : vector<3x1xf32> to vector<3x128xf32>
    %219 = vector.broadcast %217 : vector<1x128xf32> to vector<3x128xf32>
    %220 = arith.mulf %218, %219 : vector<3x128xf32>
    %221 = arith.addf %215, %220 : vector<3x128xf32>
    %222 = vector.extract_strided_slice %170 {offsets = [0, 8], sizes = [3, 1], strides = [1, 1]} : vector<3x16xf32> to vector<3x1xf32>
    %223 = vector.extract_strided_slice %169 {offsets = [8, 0], sizes = [1, 128], strides = [1, 1]} : vector<16x128xf32> to vector<1x128xf32>
    %224 = vector.broadcast %222 : vector<3x1xf32> to vector<3x128xf32>
    %225 = vector.broadcast %223 : vector<1x128xf32> to vector<3x128xf32>
    %226 = arith.mulf %224, %225 : vector<3x128xf32>
    %227 = arith.addf %221, %226 : vector<3x128xf32>
    %228 = vector.extract_strided_slice %170 {offsets = [0, 9], sizes = [3, 1], strides = [1, 1]} : vector<3x16xf32> to vector<3x1xf32>
    %229 = vector.extract_strided_slice %169 {offsets = [9, 0], sizes = [1, 128], strides = [1, 1]} : vector<16x128xf32> to vector<1x128xf32>
    %230 = vector.broadcast %228 : vector<3x1xf32> to vector<3x128xf32>
    %231 = vector.broadcast %229 : vector<1x128xf32> to vector<3x128xf32>
    %232 = arith.mulf %230, %231 : vector<3x128xf32>
    %233 = arith.addf %227, %232 : vector<3x128xf32>
    %234 = vector.extract_strided_slice %170 {offsets = [0, 10], sizes = [3, 1], strides = [1, 1]} : vector<3x16xf32> to vector<3x1xf32>
    %235 = vector.extract_strided_slice %169 {offsets = [10, 0], sizes = [1, 128], strides = [1, 1]} : vector<16x128xf32> to vector<1x128xf32>
    %236 = vector.broadcast %234 : vector<3x1xf32> to vector<3x128xf32>
    %237 = vector.broadcast %235 : vector<1x128xf32> to vector<3x128xf32>
    %238 = arith.mulf %236, %237 : vector<3x128xf32>
    %239 = arith.addf %233, %238 : vector<3x128xf32>
    %240 = vector.extract_strided_slice %170 {offsets = [0, 11], sizes = [3, 1], strides = [1, 1]} : vector<3x16xf32> to vector<3x1xf32>
    %241 = vector.extract_strided_slice %169 {offsets = [11, 0], sizes = [1, 128], strides = [1, 1]} : vector<16x128xf32> to vector<1x128xf32>
    %242 = vector.broadcast %240 : vector<3x1xf32> to vector<3x128xf32>
    %243 = vector.broadcast %241 : vector<1x128xf32> to vector<3x128xf32>
    %244 = arith.mulf %242, %243 : vector<3x128xf32>
    %245 = arith.addf %239, %244 : vector<3x128xf32>
    %246 = vector.extract_strided_slice %170 {offsets = [0, 12], sizes = [3, 1], strides = [1, 1]} : vector<3x16xf32> to vector<3x1xf32>
    %247 = vector.extract_strided_slice %169 {offsets = [12, 0], sizes = [1, 128], strides = [1, 1]} : vector<16x128xf32> to vector<1x128xf32>
    %248 = vector.broadcast %246 : vector<3x1xf32> to vector<3x128xf32>
    %249 = vector.broadcast %247 : vector<1x128xf32> to vector<3x128xf32>
    %250 = arith.mulf %248, %249 : vector<3x128xf32>
    %251 = arith.addf %245, %250 : vector<3x128xf32>
    %252 = vector.extract_strided_slice %170 {offsets = [0, 13], sizes = [3, 1], strides = [1, 1]} : vector<3x16xf32> to vector<3x1xf32>
    %253 = vector.extract_strided_slice %169 {offsets = [13, 0], sizes = [1, 128], strides = [1, 1]} : vector<16x128xf32> to vector<1x128xf32>
    %254 = vector.broadcast %252 : vector<3x1xf32> to vector<3x128xf32>
    %255 = vector.broadcast %253 : vector<1x128xf32> to vector<3x128xf32>
    %256 = arith.mulf %254, %255 : vector<3x128xf32>
    %257 = arith.addf %251, %256 : vector<3x128xf32>
    %258 = vector.extract_strided_slice %170 {offsets = [0, 14], sizes = [3, 1], strides = [1, 1]} : vector<3x16xf32> to vector<3x1xf32>
    %259 = vector.extract_strided_slice %169 {offsets = [14, 0], sizes = [1, 128], strides = [1, 1]} : vector<16x128xf32> to vector<1x128xf32>
    %260 = vector.broadcast %258 : vector<3x1xf32> to vector<3x128xf32>
    %261 = vector.broadcast %259 : vector<1x128xf32> to vector<3x128xf32>
    %262 = arith.mulf %260, %261 : vector<3x128xf32>
    %263 = arith.addf %257, %262 : vector<3x128xf32>
    %264 = vector.extract_strided_slice %170 {offsets = [0, 15], sizes = [3, 1], strides = [1, 1]} : vector<3x16xf32> to vector<3x1xf32>
    %265 = vector.extract_strided_slice %169 {offsets = [15, 0], sizes = [1, 128], strides = [1, 1]} : vector<16x128xf32> to vector<1x128xf32>
    %266 = vector.broadcast %264 : vector<3x1xf32> to vector<3x128xf32>
    %267 = vector.broadcast %265 : vector<1x128xf32> to vector<3x128xf32>
    %268 = arith.mulf %266, %267 : vector<3x128xf32>
    %269 = arith.addf %263, %268 : vector<3x128xf32>
    %270 = vector.extract_strided_slice %269 {offsets = [0, 0], sizes = [1, 128], strides = [1, 1]} : vector<3x128xf32> to vector<1x128xf32>
    %271 = vector.extract_strided_slice %269 {offsets = [1, 0], sizes = [1, 128], strides = [1, 1]} : vector<3x128xf32> to vector<1x128xf32>
    %272 = vector.extract_strided_slice %269 {offsets = [2, 0], sizes = [1, 128], strides = [1, 1]} : vector<3x128xf32> to vector<1x128xf32>
    %273 = arith.maximumf %270, %271 : vector<1x128xf32>
    %274 = arith.maximumf %273, %272 : vector<1x128xf32>
    %275 = vector.broadcast %274 : vector<1x128xf32> to vector<3x128xf32>
    %276 = arith.subf %269, %275 : vector<3x128xf32>
    %277 = math.exp %276 : vector<3x128xf32>
    %278 = vector.extract_strided_slice %277 {offsets = [0, 0], sizes = [1, 128], strides = [1, 1]} : vector<3x128xf32> to vector<1x128xf32>
    %279 = vector.extract_strided_slice %277 {offsets = [1, 0], sizes = [1, 128], strides = [1, 1]} : vector<3x128xf32> to vector<1x128xf32>
    %280 = arith.addf %278, %279 : vector<1x128xf32>
    %281 = vector.extract_strided_slice %277 {offsets = [2, 0], sizes = [1, 128], strides = [1, 1]} : vector<3x128xf32> to vector<1x128xf32>
    %282 = arith.addf %280, %281 : vector<1x128xf32>
    %283 = vector.broadcast %282 : vector<1x128xf32> to vector<3x128xf32>
    %284 = arith.divf %277, %283 : vector<3x128xf32>
    %285 = tpu.transpose %284, [1, 0] : vector<3x128xf32> -> vector<128x3xf32>
    %c0_14 = arith.constant 0 : index
    %c0_15 = arith.constant 0 : index
    %286 = vector.load %arg8[%c0_14, %c0_15] : memref<128x3xf32, #tpu.memory_space<vmem>>, vector<128x3xf32>
    tpu.vector_store %arg8[%c0_14, %c0_15], %285 {strides = array<i32>} : memref<128x3xf32, #tpu.memory_space<vmem>>, vector<128x3xf32>,
    return
  }
  func.func @transform_0(%arg0: i32) -> (i32, i32) {
    %c0_i32 = arith.constant 0 : i32
    %c0_i32_0 = arith.constant 0 : i32
    return %arg0, %c0_i32 : i32, i32
  }
  func.func @transform_1(%arg0: i32) -> (i32, i32) {
    %c0_i32 = arith.constant 0 : i32
    %c0_i32_0 = arith.constant 0 : i32
    %c0_i32_1 = arith.constant 0 : i32
    return %c0_i32, %c0_i32_0 : i32, i32
  }
  func.func @transform_2(%arg0: i32) -> (i32, i32) {
    %c0_i32 = arith.constant 0 : i32
    %c0_i32_0 = arith.constant 0 : i32
    %c0_i32_1 = arith.constant 0 : i32
    return %c0_i32, %c0_i32_0 : i32, i32
  }
  func.func @transform_3(%arg0: i32) -> (i32, i32) {
    %c0_i32 = arith.constant 0 : i32
    %c0_i32_0 = arith.constant 0 : i32
    %c0_i32_1 = arith.constant 0 : i32
    return %c0_i32, %c0_i32_0 : i32, i32
  }
  func.func @transform_4(%arg0: i32) -> (i32, i32) {
    %c0_i32 = arith.constant 0 : i32
    %c0_i32_0 = arith.constant 0 : i32
    %c0_i32_1 = arith.constant 0 : i32
    return %c0_i32, %c0_i32_0 : i32, i32
  }
  func.func @transform_5(%arg0: i32) -> (i32, i32) {
    %c0_i32 = arith.constant 0 : i32
    %c0_i32_0 = arith.constant 0 : i32
    %c0_i32_1 = arith.constant 0 : i32
    return %c0_i32, %c0_i32_0 : i32, i32
  }
  func.func @transform_6(%arg0: i32) -> (i32, i32) {
    %c0_i32 = arith.constant 0 : i32
    %c0_i32_0 = arith.constant 0 : i32
    %c0_i32_1 = arith.constant 0 : i32
    return %c0_i32, %c0_i32_0 : i32, i32
  }
  func.func @transform_7(%arg0: i32) -> (i32, i32) {
    %c0_i32 = arith.constant 0 : i32
    %c0_i32_0 = arith.constant 0 : i32
    return %arg0, %c0_i32 : i32, i32
  }
}

</mosaic_0001>

<llo_original>
// kernel: tpu_custom_call.1
$region0: #{tpu_custom_call.1}
  #allocation0 [shape = 'u32[]', space=smem, size = 0x4, offset = 0x4, fixed_abs, tag = 'smem constant byte address 0x4 - core index']
  #allocation1 [shape = 'u32[72,128]{1,0:T(1,128)}', space=vmem, size = 0x9000, scoped, tag = 'internal scratch']
  %s0 = inlined_call_operand.vmem [shape: f32[128,10], index: 0, kind: input, shape index: {}]
  %s1 = inlined_call_operand.vmem [shape: f32[16,10], index: 1, kind: input, shape index: {}]
  %s2 = inlined_call_operand.vmem [shape: f32[16,1], index: 2, kind: input, shape index: {}]
  %s3 = inlined_call_operand.vmem [shape: f32[16,16], index: 3, kind: input, shape index: {}]
  %s4 = inlined_call_operand.vmem [shape: f32[16,1], index: 4, kind: input, shape index: {}]
  %s5 = inlined_call_operand.vmem [shape: f32[3,16], index: 5, kind: input, shape index: {}]
  %s6 = inlined_call_operand.vmem [shape: f32[3,1], index: 6, kind: input, shape index: {}]
  %s7 = inlined_call_operand.vmem [shape: f32[128,3], index: 7, kind: output, shape index: {}]
  %s8 = sld [smem:[#allocation0]]
  $region38: #{tpu_custom_call.1} parent=0
    _
  %s10 = ssub.s32 1, %s8
  %s11 = scalar_select 0, %s10, %s8
  // Predicated region
  $region2: #{tpu_custom_call.1} parent=0 // pred_check
    _
  $region3: #{tpu_custom_call.1} parent=0 // pred_check_branch
    %13 = sbr.rel (0) target = $region5
  $region4: #{tpu_custom_call.1} parent=0 // pred_region
    _
  $region5: #{tpu_custom_call.1} parent=0 // pred_fallthru
    _
  // Predicated region
  $region6: #{tpu_custom_call.1} parent=0 // pred_check
    _
  $region7: #{tpu_custom_call.1} parent=0 // pred_check_branch
    %15 = sbr.rel (0) target = $region9
  $region8: #{tpu_custom_call.1} parent=0 // pred_region
    _
  $region9: #{tpu_custom_call.1} parent=0 // pred_fallthru
    _
  // Predicated region
  $region10: #{tpu_custom_call.1} parent=0 // pred_check
    _
  $region11: #{tpu_custom_call.1} parent=0 // pred_check_branch
    %17 = sbr.rel (0) target = $region13
  $region12: #{tpu_custom_call.1} parent=0 // pred_region
    _
  $region13: #{tpu_custom_call.1} parent=0 // pred_fallthru
    _
  // Predicated region
  $region14: #{tpu_custom_call.1} parent=0 // pred_check
    _
  $region15: #{tpu_custom_call.1} parent=0 // pred_check_branch
    %19 = sbr.rel (0) target = $region17
  $region16: #{tpu_custom_call.1} parent=0 // pred_region
    _
  $region17: #{tpu_custom_call.1} parent=0 // pred_fallthru
    _
  // Predicated region
  $region18: #{tpu_custom_call.1} parent=0 // pred_check
    _
  $region19: #{tpu_custom_call.1} parent=0 // pred_check_branch
    %21 = sbr.rel (0) target = $region21
  $region20: #{tpu_custom_call.1} parent=0 // pred_region
    _
  $region21: #{tpu_custom_call.1} parent=0 // pred_fallthru
    _
  // Predicated region
  $region22: #{tpu_custom_call.1} parent=0 // pred_check
    _
  $region23: #{tpu_custom_call.1} parent=0 // pred_check_branch
    %23 = sbr.rel (0) target = $region25
  $region24: #{tpu_custom_call.1} parent=0 // pred_region
    _
  $region25: #{tpu_custom_call.1} parent=0 // pred_fallthru
    _
  // Predicated region
  $region26: #{tpu_custom_call.1} parent=0 // pred_check
    _
  $region27: #{tpu_custom_call.1} parent=0 // pred_check_branch
    %25 = sbr.rel (0) target = $region29
  $region28: #{tpu_custom_call.1} parent=0 // pred_region
    _
  $region29: #{tpu_custom_call.1} parent=0 // pred_fallthru
    _
  %v26 = vld [vmem:[%s0] sm:$0xff]
  %v27 = vld [vmem:[%s0 + $0x8] sm:$0xff]
  %v28 = vld [vmem:[%s0 + $0x10] sm:$0xff]
  %v29 = vld [vmem:[%s0 + $0x18] sm:$0xff]
  %v30 = vld [vmem:[%s0 + $0x20] sm:$0xff]
  %v31 = vld [vmem:[%s0 + $0x28] sm:$0xff]
  %v32 = vld [vmem:[%s0 + $0x30] sm:$0xff]
  %v33 = vld [vmem:[%s0 + $0x38] sm:$0xff]
  %v34 = vld [vmem:[%s0 + $0x40] sm:$0xff]
  %v35 = vld [vmem:[%s0 + $0x48] sm:$0xff]
  %v36 = vld [vmem:[%s0 + $0x50] sm:$0xff]
  %v37 = vld [vmem:[%s0 + $0x58] sm:$0xff]
  %v38 = vld [vmem:[%s0 + $0x60] sm:$0xff]
  %v39 = vld [vmem:[%s0 + $0x68] sm:$0xff]
  %v40 = vld [vmem:[%s0 + $0x70] sm:$0xff]
  %v41 = vld [vmem:[%s0 + $0x78] sm:$0xff]
  %42 = vxpose.xlu0.b32.start [1/16] %v26, 128
  %43 = vxpose.xlu0.b32.cont [2/16] %v27, 128
  %44 = vxpose.xlu0.b32.cont [3/16] %v28, 128
  %45 = vxpose.xlu0.b32.cont [4/16] %v29, 128
  %46 = vxpose.xlu0.b32.cont [5/16] %v30, 128
  %47 = vxpose.xlu0.b32.cont [6/16] %v31, 128
  %48 = vxpose.xlu0.b32.cont [7/16] %v32, 128
  %49 = vxpose.xlu0.b32.cont [8/16] %v33, 128
  %50 = vxpose.xlu0.b32.cont [9/16] %v34, 128
  %51 = vxpose.xlu0.b32.cont [10/16] %v35, 128
  %52 = vxpose.xlu0.b32.cont [11/16] %v36, 128
  %53 = vxpose.xlu0.b32.cont [12/16] %v37, 128
  %54 = vxpose.xlu0.b32.cont [13/16] %v38, 128
  %55 = vxpose.xlu0.b32.cont [14/16] %v39, 128
  %56 = vxpose.xlu0.b32.cont [15/16] %v40, 128
  %57 = vxpose.xlu0.b32.end [16/16] %v41, 128
  %v58 = vpop.trf.xlu0
  %v59 = vpop.trf.xlu0
  %v60 = vpop.trf.xlu0
  %v61 = vpop.trf.xlu0
  %v62 = vpop.trf.xlu0
  %v63 = vpop.trf.xlu0
  %v64 = vpop.trf.xlu0
  %v65 = vpop.trf.xlu0
  %v66 = vpop.trf.xlu0
  %v67 = vpop.trf.xlu0
  %v68 = vpop.trf.xlu0
  %v69 = vpop.trf.xlu0
  %v70 = vpop.trf.xlu0
  %v71 = vpop.trf.xlu0
  %v72 = vpop.trf.xlu0
  %v73 = vpop.trf.xlu0
  %v74 = vld [vmem:[%s1] sm:$0xff]
  %v75 = vld [vmem:[%s1 + $0x8] sm:$0xff]
  %v76 = vld [vmem:[%s2] sm:$0xff]
  %v77 = vld [vmem:[%s2 + $0x8] sm:$0xff]
  %79 = vset.pattern.permute.xlu0 0
  %80 = vperm.xlu0 %79, %v76
  %v81 = vpop.permute.xlu0 %80
  %84 = vset.pattern.permute.xlu0 0
  %85 = vperm.xlu0 %84, %v77
  %v86 = vpop.permute.xlu0 %85
  %89 = vset.pattern.permute.xlu0 0
  %90 = vperm.xlu0 %89, %v74
  %v91 = vpop.permute.xlu0 %90
  %94 = vset.pattern.permute.xlu0 0
  %95 = vperm.xlu0 %94, %v75
  %v96 = vpop.permute.xlu0 %95
  %v98 = vperm.slane %v58, 0
  %v99 = vmul.f32 %v91, %v98
  %v100 = vmul.f32 %v96, %v98
  %v101 = vadd.f32 %v81, %v99
  %v102 = vadd.f32 %v86, %v100
  %103 = vset.pattern.permute.xlu0 1
  %104 = vperm.xlu0 %103, %v74
  %v105 = vpop.permute.xlu0 %104
  %107 = vset.pattern.permute.xlu0 1
  %108 = vperm.xlu0 %107, %v75
  %v109 = vpop.permute.xlu0 %108
  %v111 = vperm.slane %v58, 1
  %v112 = vmul.f32 %v105, %v111
  %v113 = vmul.f32 %v109, %v111
  %v114 = vadd.f32 %v101, %v112
  %v115 = vadd.f32 %v102, %v113
  %116 = vset.pattern.permute.xlu0 2
  %117 = vperm.xlu0 %116, %v74
  %v118 = vpop.permute.xlu0 %117
  %120 = vset.pattern.permute.xlu0 2
  %121 = vperm.xlu0 %120, %v75
  %v122 = vpop.permute.xlu0 %121
  %v124 = vperm.slane %v58, 2
  %v125 = vmul.f32 %v118, %v124
  %v126 = vmul.f32 %v122, %v124
  %v127 = vadd.f32 %v114, %v125
  %v128 = vadd.f32 %v115, %v126
  %129 = vset.pattern.permute.xlu0 3
  %130 = vperm.xlu0 %129, %v74
  %v131 = vpop.permute.xlu0 %130
  %133 = vset.pattern.permute.xlu0 3
  %134 = vperm.xlu0 %133, %v75
  %v135 = vpop.permute.xlu0 %134
  %v137 = vperm.slane %v58, 3
  %v138 = vmul.f32 %v131, %v137
  %v139 = vmul.f32 %v135, %v137
  %v140 = vadd.f32 %v127, %v138
  %v141 = vadd.f32 %v128, %v139
  %142 = vset.pattern.permute.xlu0 4
  %143 = vperm.xlu0 %142, %v74
  %v144 = vpop.permute.xlu0 %143
  %146 = vset.pattern.permute.xlu0 4
  %147 = vperm.xlu0 %146, %v75
  %v148 = vpop.permute.xlu0 %147
  %v150 = vperm.slane %v58, 4
  %v151 = vmul.f32 %v144, %v150
  %v152 = vmul.f32 %v148, %v150
  %v153 = vadd.f32 %v140, %v151
  %v154 = vadd.f32 %v141, %v152
  %155 = vset.pattern.permute.xlu0 5
  %156 = vperm.xlu0 %155, %v74
  %v157 = vpop.permute.xlu0 %156
  %159 = vset.pattern.permute.xlu0 5
  %160 = vperm.xlu0 %159, %v75
  %v161 = vpop.permute.xlu0 %160
  %v163 = vperm.slane %v58, 5
  %v164 = vmul.f32 %v157, %v163
  %v165 = vmul.f32 %v161, %v163
  %v166 = vadd.f32 %v153, %v164
  %v167 = vadd.f32 %v154, %v165
  %168 = vset.pattern.permute.xlu0 6
  %169 = vperm.xlu0 %168, %v74
  %v170 = vpop.permute.xlu0 %169
  %172 = vset.pattern.permute.xlu0 6
  %173 = vperm.xlu0 %172, %v75
  %v174 = vpop.permute.xlu0 %173
  %v176 = vperm.slane %v58, 6
  %v177 = vmul.f32 %v170, %v176
  %v178 = vmul.f32 %v174, %v176
  %v179 = vadd.f32 %v166, %v177
  %v180 = vadd.f32 %v167, %v178
  %181 = vset.pattern.permute.xlu0 7
  %182 = vperm.xlu0 %181, %v74
  %v183 = vpop.permute.xlu0 %182
  %185 = vset.pattern.permute.xlu0 7
  %186 = vperm.xlu0 %185, %v75
  %v187 = vpop.permute.xlu0 %186
  %v189 = vperm.slane %v58, 7
  %v190 = vmul.f32 %v183, %v189
  %v191 = vmul.f32 %v187, %v189
  %v192 = vadd.f32 %v179, %v190
  %v193 = vadd.f32 %v180, %v191
  %194 = vset.pattern.permute.xlu0 8
  %195 = vperm.xlu0 %194, %v74
  %v196 = vpop.permute.xlu0 %195
  %198 = vset.pattern.permute.xlu0 8
  %199 = vperm.xlu0 %198, %v75
  %v200 = vpop.permute.xlu0 %199
  %v202 = vperm.slane %v59, 0
  %v203 = vmul.f32 %v196, %v202
  %v204 = vmul.f32 %v200, %v202
  %v205 = vadd.f32 %v192, %v203
  %v206 = vadd.f32 %v193, %v204
  %207 = vset.pattern.permute.xlu0 9
  %208 = vperm.xlu0 %207, %v74
  %v209 = vpop.permute.xlu0 %208
  %211 = vset.pattern.permute.xlu0 9
  %212 = vperm.xlu0 %211, %v75
  %v213 = vpop.permute.xlu0 %212
  %v215 = vperm.slane %v59, 1
  %v216 = vmul.f32 %v209, %v215
  %v217 = vmul.f32 %v213, %v215
  %v218 = vadd.f32 %v205, %v216
  %v219 = vadd.f32 %v206, %v217
  %v220 = vmax.f32 %v218, 0.0
  %v221 = vmax.f32 %v219, 0.0
  %v222 = vld [vmem:[%s3] sm:$0xff]
  %v223 = vld [vmem:[%s3 + $0x8] sm:$0xff]
  %v224 = vld [vmem:[%s4] sm:$0xff]
  %v225 = vld [vmem:[%s4 + $0x8] sm:$0xff]
  %227 = vset.pattern.permute.xlu0 0
  %228 = vperm.xlu0 %227, %v224
  %v229 = vpop.permute.xlu0 %228
  %232 = vset.pattern.permute.xlu0 0
  %233 = vperm.xlu0 %232, %v225
  %v234 = vpop.permute.xlu0 %233
  %237 = vset.pattern.permute.xlu0 0
  %238 = vperm.xlu0 %237, %v222
  %v239 = vpop.permute.xlu0 %238
  %242 = vset.pattern.permute.xlu0 0
  %243 = vperm.xlu0 %242, %v223
  %v244 = vpop.permute.xlu0 %243
  %v246 = vperm.slane %v220, 0
  %v247 = vmul.f32 %v239, %v246
  %v248 = vmul.f32 %v244, %v246
  %v249 = vadd.f32 %v229, %v247
  %v250 = vadd.f32 %v234, %v248
  %251 = vset.pattern.permute.xlu0 1
  %252 = vperm.xlu0 %251, %v222
  %v253 = vpop.permute.xlu0 %252
  %255 = vset.pattern.permute.xlu0 1
  %256 = vperm.xlu0 %255, %v223
  %v257 = vpop.permute.xlu0 %256
  %v259 = vperm.slane %v220, 1
  %v260 = vmul.f32 %v253, %v259
  %v261 = vmul.f32 %v257, %v259
  %v262 = vadd.f32 %v249, %v260
  %v263 = vadd.f32 %v250, %v261
  %264 = vset.pattern.permute.xlu0 2
  %265 = vperm.xlu0 %264, %v222
  %v266 = vpop.permute.xlu0 %265
  %268 = vset.pattern.permute.xlu0 2
  %269 = vperm.xlu0 %268, %v223
  %v270 = vpop.permute.xlu0 %269
  %v272 = vperm.slane %v220, 2
  %v273 = vmul.f32 %v266, %v272
  %v274 = vmul.f32 %v270, %v272
  %v275 = vadd.f32 %v262, %v273
  %v276 = vadd.f32 %v263, %v274
  %277 = vset.pattern.permute.xlu0 3
  %278 = vperm.xlu0 %277, %v222
  %v279 = vpop.permute.xlu0 %278
  %281 = vset.pattern.permute.xlu0 3
  %282 = vperm.xlu0 %281, %v223
  %v283 = vpop.permute.xlu0 %282
  %v285 = vperm.slane %v220, 3
  %v286 = vmul.f32 %v279, %v285
  %v287 = vmul.f32 %v283, %v285
  %v288 = vadd.f32 %v275, %v286
  %v289 = vadd.f32 %v276, %v287
  %290 = vset.pattern.permute.xlu0 4
  %291 = vperm.xlu0 %290, %v222
  %v292 = vpop.permute.xlu0 %291
  %294 = vset.pattern.permute.xlu0 4
  %295 = vperm.xlu0 %294, %v223
  %v296 = vpop.permute.xlu0 %295
  %v298 = vperm.slane %v220, 4
  %v299 = vmul.f32 %v292, %v298
  %v300 = vmul.f32 %v296, %v298
  %v301 = vadd.f32 %v288, %v299
  %v302 = vadd.f32 %v289, %v300
  %303 = vset.pattern.permute.xlu0 5
  %304 = vperm.xlu0 %303, %v222
  %v305 = vpop.permute.xlu0 %304
  %307 = vset.pattern.permute.xlu0 5
  %308 = vperm.xlu0 %307, %v223
  %v309 = vpop.permute.xlu0 %308
  %v311 = vperm.slane %v220, 5
  %v312 = vmul.f32 %v305, %v311
  %v313 = vmul.f32 %v309, %v311
  %v314 = vadd.f32 %v301, %v312
  %v315 = vadd.f32 %v302, %v313
  %316 = vset.pattern.permute.xlu0 6
  %317 = vperm.xlu0 %316, %v222
  %v318 = vpop.permute.xlu0 %317
  %320 = vset.pattern.permute.xlu0 6
  %321 = vperm.xlu0 %320, %v223
  %v322 = vpop.permute.xlu0 %321
  %v324 = vperm.slane %v220, 6
  %v325 = vmul.f32 %v318, %v324
  %v326 = vmul.f32 %v322, %v324
  %v327 = vadd.f32 %v314, %v325
  %v328 = vadd.f32 %v315, %v326
  %329 = vset.pattern.permute.xlu0 7
  %330 = vperm.xlu0 %329, %v222
  %v331 = vpop.permute.xlu0 %330
  %333 = vset.pattern.permute.xlu0 7
  %334 = vperm.xlu0 %333, %v223
  %v335 = vpop.permute.xlu0 %334
  %v337 = vperm.slane %v220, 7
  %v338 = vmul.f32 %v331, %v337
  %v339 = vmul.f32 %v335, %v337
  %v340 = vadd.f32 %v327, %v338
  %v341 = vadd.f32 %v328, %v339
  %342 = vset.pattern.permute.xlu0 8
  %343 = vperm.xlu0 %342, %v222
  %v344 = vpop.permute.xlu0 %343
  %346 = vset.pattern.permute.xlu0 8
  %347 = vperm.xlu0 %346, %v223
  %v348 = vpop.permute.xlu0 %347
  %v350 = vperm.slane %v221, 0
  %v351 = vmul.f32 %v344, %v350
  %v352 = vmul.f32 %v348, %v350
  %v353 = vadd.f32 %v340, %v351
  %v354 = vadd.f32 %v341, %v352
  %355 = vset.pattern.permute.xlu0 9
  %356 = vperm.xlu0 %355, %v222
  %v357 = vpop.permute.xlu0 %356
  %359 = vset.pattern.permute.xlu0 9
  %360 = vperm.xlu0 %359, %v223
  %v361 = vpop.permute.xlu0 %360
  %v363 = vperm.slane %v221, 1
  %v364 = vmul.f32 %v357, %v363
  %v365 = vmul.f32 %v361, %v363
  %v366 = vadd.f32 %v353, %v364
  %v367 = vadd.f32 %v354, %v365
  %368 = vset.pattern.permute.xlu0 10
  %369 = vperm.xlu0 %368, %v222
  %v370 = vpop.permute.xlu0 %369
  %372 = vset.pattern.permute.xlu0 10
  %373 = vperm.xlu0 %372, %v223
  %v374 = vpop.permute.xlu0 %373
  %v376 = vperm.slane %v221, 2
  %v377 = vmul.f32 %v370, %v376
  %v378 = vmul.f32 %v374, %v376
  %v379 = vadd.f32 %v366, %v377
  %v380 = vadd.f32 %v367, %v378
  %381 = vset.pattern.permute.xlu0 11
  %382 = vperm.xlu0 %381, %v222
  %v383 = vpop.permute.xlu0 %382
  %385 = vset.pattern.permute.xlu0 11
  %386 = vperm.xlu0 %385, %v223
  %v387 = vpop.permute.xlu0 %386
  %v389 = vperm.slane %v221, 3
  %v390 = vmul.f32 %v383, %v389
  %v391 = vmul.f32 %v387, %v389
  %v392 = vadd.f32 %v379, %v390
  %v393 = vadd.f32 %v380, %v391
  %394 = vset.pattern.permute.xlu0 12
  %395 = vperm.xlu0 %394, %v222
  %v396 = vpop.permute.xlu0 %395
  %398 = vset.pattern.permute.xlu0 12
  %399 = vperm.xlu0 %398, %v223
  %v400 = vpop.permute.xlu0 %399
  %v402 = vperm.slane %v221, 4
  %v403 = vmul.f32 %v396, %v402
  %v404 = vmul.f32 %v400, %v402
  %v405 = vadd.f32 %v392, %v403
  %v406 = vadd.f32 %v393, %v404
  %407 = vset.pattern.permute.xlu0 13
  %408 = vperm.xlu0 %407, %v222
  %v409 = vpop.permute.xlu0 %408
  %411 = vset.pattern.permute.xlu0 13
  %412 = vperm.xlu0 %411, %v223
  %v413 = vpop.permute.xlu0 %412
  %v415 = vperm.slane %v221, 5
  %v416 = vmul.f32 %v409, %v415
  %v417 = vmul.f32 %v413, %v415
  %v418 = vadd.f32 %v405, %v416
  %v419 = vadd.f32 %v406, %v417
  %420 = vset.pattern.permute.xlu0 14
  %421 = vperm.xlu0 %420, %v222
  %v422 = vpop.permute.xlu0 %421
  %424 = vset.pattern.permute.xlu0 14
  %425 = vperm.xlu0 %424, %v223
  %v426 = vpop.permute.xlu0 %425
  %v428 = vperm.slane %v221, 6
  %v429 = vmul.f32 %v422, %v428
  %v430 = vmul.f32 %v426, %v428
  %v431 = vadd.f32 %v418, %v429
  %v432 = vadd.f32 %v419, %v430
  %433 = vset.pattern.permute.xlu0 15
  %434 = vperm.xlu0 %433, %v222
  %v435 = vpop.permute.xlu0 %434
  %437 = vset.pattern.permute.xlu0 15
  %438 = vperm.xlu0 %437, %v223
  %v439 = vpop.permute.xlu0 %438
  %v441 = vperm.slane %v221, 7
  %v442 = vmul.f32 %v435, %v441
  %v443 = vmul.f32 %v439, %v441
  %v444 = vadd.f32 %v431, %v442
  %v445 = vadd.f32 %v432, %v443
  %v446 = vmax.f32 %v444, 0.0
  %v447 = vmax.f32 %v445, 0.0
  %v448 = vld [vmem:[%s5] sm:$0x7]
  %v449 = vld [vmem:[%s6] sm:$0x7]
  %451 = vset.pattern.permute.xlu0 0
  %452 = vperm.xlu0 %451, %v449
  %v453 = vpop.permute.xlu0 %452
  %456 = vset.pattern.permute.xlu0 0
  %457 = vperm.xlu0 %456, %v448
  %v458 = vpop.permute.xlu0 %457
  %v460 = vperm.slane %v446, 0
  %v461 = vmul.f32 %v458, %v460
  %v462 = vadd.f32 %v453, %v461
  %463 = vset.pattern.permute.xlu0 1
  %464 = vperm.xlu0 %463, %v448
  %v465 = vpop.permute.xlu0 %464
  %v467 = vperm.slane %v446, 1
  %v468 = vmul.f32 %v465, %v467
  %v469 = vadd.f32 %v462, %v468
  %470 = vset.pattern.permute.xlu0 2
  %471 = vperm.xlu0 %470, %v448
  %v472 = vpop.permute.xlu0 %471
  %v474 = vperm.slane %v446, 2
  %v475 = vmul.f32 %v472, %v474
  %v476 = vadd.f32 %v469, %v475
  %477 = vset.pattern.permute.xlu0 3
  %478 = vperm.xlu0 %477, %v448
  %v479 = vpop.permute.xlu0 %478
  %v481 = vperm.slane %v446, 3
  %v482 = vmul.f32 %v479, %v481
  %v483 = vadd.f32 %v476, %v482
  %484 = vset.pattern.permute.xlu0 4
  %485 = vperm.xlu0 %484, %v448
  %v486 = vpop.permute.xlu0 %485
  %v488 = vperm.slane %v446, 4
  %v489 = vmul.f32 %v486, %v488
  %v490 = vadd.f32 %v483, %v489
  %491 = vset.pattern.permute.xlu0 5
  %492 = vperm.xlu0 %491, %v448
  %v493 = vpop.permute.xlu0 %492
  %v495 = vperm.slane %v446, 5
  %v496 = vmul.f32 %v493, %v495
  %v497 = vadd.f32 %v490, %v496
  %498 = vset.pattern.permute.xlu0 6
  %499 = vperm.xlu0 %498, %v448
  %v500 = vpop.permute.xlu0 %499
  %v502 = vperm.slane %v446, 6
  %v503 = vmul.f32 %v500, %v502
  %v504 = vadd.f32 %v497, %v503
  %505 = vset.pattern.permute.xlu0 7
  %506 = vperm.xlu0 %505, %v448
  %v507 = vpop.permute.xlu0 %506
  %v509 = vperm.slane %v446, 7
  %v510 = vmul.f32 %v507, %v509
  %v511 = vadd.f32 %v504, %v510
  %512 = vset.pattern.permute.xlu0 8
  %513 = vperm.xlu0 %512, %v448
  %v514 = vpop.permute.xlu0 %513
  %v516 = vperm.slane %v447, 0
  %v517 = vmul.f32 %v514, %v516
  %v518 = vadd.f32 %v511, %v517
  %519 = vset.pattern.permute.xlu0 9
  %520 = vperm.xlu0 %519, %v448
  %v521 = vpop.permute.xlu0 %520
  %v523 = vperm.slane %v447, 1
  %v524 = vmul.f32 %v521, %v523
  %v525 = vadd.f32 %v518, %v524
  %526 = vset.pattern.permute.xlu0 10
  %527 = vperm.xlu0 %526, %v448
  %v528 = vpop.permute.xlu0 %527
  %v530 = vperm.slane %v447, 2
  %v531 = vmul.f32 %v528, %v530
  %v532 = vadd.f32 %v525, %v531
  %533 = vset.pattern.permute.xlu0 11
  %534 = vperm.xlu0 %533, %v448
  %v535 = vpop.permute.xlu0 %534
  %v537 = vperm.slane %v447, 3
  %v538 = vmul.f32 %v535, %v537
  %v539 = vadd.f32 %v532, %v538
  %540 = vset.pattern.permute.xlu0 12
  %541 = vperm.xlu0 %540, %v448
  %v542 = vpop.permute.xlu0 %541
  %v544 = vperm.slane %v447, 4
  %v545 = vmul.f32 %v542, %v544
  %v546 = vadd.f32 %v539, %v545
  %547 = vset.pattern.permute.xlu0 13
  %548 = vperm.xlu0 %547, %v448
  %v549 = vpop.permute.xlu0 %548
  %v551 = vperm.slane %v447, 5
  %v552 = vmul.f32 %v549, %v551
  %v553 = vadd.f32 %v546, %v552
  %554 = vset.pattern.permute.xlu0 14
  %555 = vperm.xlu0 %554, %v448
  %v556 = vpop.permute.xlu0 %555
  %v558 = vperm.slane %v447, 6
  %v559 = vmul.f32 %v556, %v558
  %v560 = vadd.f32 %v553, %v559
  %561 = vset.pattern.permute.xlu0 15
  %562 = vperm.xlu0 %561, %v448
  %v563 = vpop.permute.xlu0 %562
  %v565 = vperm.slane %v447, 7
  %v566 = vmul.f32 %v563, %v565
  %v567 = vadd.f32 %v560, %v566
  %v569 = vrot.slane %v567, 1
  %v571 = vmax.f32 %v567, %v569
  %v572 = vrot.slane %v567, 2
  %v574 = vmax.f32 %v571, %v572
  %v575 = vperm.slane %v574, 0
  %v576 = vsub.f32 %v567, %v575
  %v577 = vmul.f32 %v576, 1.442695
  %v578 = vpow.pop %v577
  %v580 = vrot.slane %v578, 1
  %v582 = vadd.f32 %v578, %v580
  %v583 = vrot.slane %v578, 2
  %v585 = vadd.f32 %v582, %v583
  %v586 = vperm.slane %v585, 0
  %v587 = vrcp.pop %v586
  %v588 = vmul.f32 %v586, %v587
  %v589 = vsub.f32 1.0, %v588
  %v590 = vmul.f32 %v587, %v589
  %v591 = vadd.f32 %v587, %v590
  %vm592 = vweird.f32 %v586
  %vm593 = vweird.f32 %v587
  %vm594 = vmor %vm592, %vm593
  %v595 = vsel %vm594, %v587, %v591
  %v596 = vand.u32 2147483647, %v586
  %vm597 = vcmp.eq.f32.partialorder %v596, 8.507059e+37
  %v598 = vand.u32 %v586, 2147483648
  %v599 = vor.u32 1.1754944e-38, %v598
  %v600 = vsel %vm597, %v599, %v595
  %v601 = vmul.f32 %v578, %v600
  %602 = vxpose.xlu0.b32.start [1/16] %v601, 128
  %603 = vxpose.xlu0.b32.cont [2/16] 0.0, 128
  %604 = vxpose.xlu0.b32.cont [3/16] 0.0, 128
  %605 = vxpose.xlu0.b32.cont [4/16] 0.0, 128
  %606 = vxpose.xlu0.b32.cont [5/16] 0.0, 128
  %607 = vxpose.xlu0.b32.cont [6/16] 0.0, 128
  %608 = vxpose.xlu0.b32.cont [7/16] 0.0, 128
  %609 = vxpose.xlu0.b32.cont [8/16] 0.0, 128
  %610 = vxpose.xlu0.b32.cont [9/16] 0.0, 128
  %611 = vxpose.xlu0.b32.cont [10/16] 0.0, 128
  %612 = vxpose.xlu0.b32.cont [11/16] 0.0, 128
  %613 = vxpose.xlu0.b32.cont [12/16] 0.0, 128
  %614 = vxpose.xlu0.b32.cont [13/16] 0.0, 128
  %615 = vxpose.xlu0.b32.cont [14/16] 0.0, 128
  %616 = vxpose.xlu0.b32.cont [15/16] 0.0, 128
  %617 = vxpose.xlu0.b32.end [16/16] 0.0, 128
  %v618 = vpop.trf.xlu0
  %v619 = vpop.trf.xlu0
  %v620 = vpop.trf.xlu0
  %v621 = vpop.trf.xlu0
  %v622 = vpop.trf.xlu0
  %v623 = vpop.trf.xlu0
  %v624 = vpop.trf.xlu0
  %v625 = vpop.trf.xlu0
  %v626 = vpop.trf.xlu0
  %v627 = vpop.trf.xlu0
  %v628 = vpop.trf.xlu0
  %v629 = vpop.trf.xlu0
  %v630 = vpop.trf.xlu0
  %v631 = vpop.trf.xlu0
  %v632 = vpop.trf.xlu0
  %v633 = vpop.trf.xlu0
  %vm634 = vcmask 23552
  %635 = vst.msk [vmem:[%s7] sm:$0xff] %vm634, %v618
  %636 = vst.msk [vmem:[%s7 + $0x8] sm:$0xff] %vm634, %v619
  %637 = vst.msk [vmem:[%s7 + $0x10] sm:$0xff] %vm634, %v620
  %638 = vst.msk [vmem:[%s7 + $0x18] sm:$0xff] %vm634, %v621
  %639 = vst.msk [vmem:[%s7 + $0x20] sm:$0xff] %vm634, %v622
  %640 = vst.msk [vmem:[%s7 + $0x28] sm:$0xff] %vm634, %v623
  %641 = vst.msk [vmem:[%s7 + $0x30] sm:$0xff] %vm634, %v624
  %642 = vst.msk [vmem:[%s7 + $0x38] sm:$0xff] %vm634, %v625
  %643 = vst.msk [vmem:[%s7 + $0x40] sm:$0xff] %vm634, %v626
  %644 = vst.msk [vmem:[%s7 + $0x48] sm:$0xff] %vm634, %v627
  %645 = vst.msk [vmem:[%s7 + $0x50] sm:$0xff] %vm634, %v628
  %646 = vst.msk [vmem:[%s7 + $0x58] sm:$0xff] %vm634, %v629
  %647 = vst.msk [vmem:[%s7 + $0x60] sm:$0xff] %vm634, %v630
  %648 = vst.msk [vmem:[%s7 + $0x68] sm:$0xff] %vm634, %v631
  %649 = vst.msk [vmem:[%s7 + $0x70] sm:$0xff] %vm634, %v632
  %650 = vst.msk [vmem:[%s7 + $0x78] sm:$0xff] %vm634, %v633
  // Predicated region
  $region30: #{tpu_custom_call.1} parent=0 // pred_check
    _
  $region31: #{tpu_custom_call.1} parent=0 // pred_check_branch
    %652 = sbr.rel (0) target = $region33
  $region32: #{tpu_custom_call.1} parent=0 // pred_region
    _
  $region33: #{tpu_custom_call.1} parent=0 // pred_fallthru
    _
  // Predicated region
  $region34: #{tpu_custom_call.1} parent=0 // pred_check
    _
  $region35: #{tpu_custom_call.1} parent=0 // pred_check_branch
    %654 = sbr.rel (0) target = $region37
  $region36: #{tpu_custom_call.1} parent=0 // pred_region
    _
  $region37: #{tpu_custom_call.1} parent=0 // pred_fallthru
    _

</llo_original>
